<compile_context>
chip_gen: v6e
topology: v6e:2x2x1
jax: 0.10.0
libtpu: 0.0.40
codegen_flags: <defaults>
</compile_context>

<pallas_src>
import functools
from typing import NamedTuple

import jax
import jax.numpy as jnp
from jax.experimental import pallas as pl
from jax.experimental.pallas import tpu as pltpu


class RayBundle(NamedTuple):
    origins: jax.Array      # (B, H, W, 3)
    directions: jax.Array   # (B, H, W, 3)
    lengths: jax.Array      # (B, H, W, n_pts_per_ray)
    xys: jax.Array          # (B, H, W, 2)


def get_xy_grid(image_height: int, image_width: int) -> jax.Array:
    # TODO(synk): exact yanerf `get_xy_grid` source not provided; assume a
    # pixel-index meshgrid stacked as (x, y), shape (1, H, W, 2). If the real
    # implementation uses NDC or pixel-center (+0.5) coords, adjust dx/dy below.
    xs = jnp.arange(image_width, dtype=jnp.float32)
    ys = jnp.arange(image_height, dtype=jnp.float32)
    xg, yg = jnp.meshgrid(xs, ys, indexing="xy")      # each (H, W)
    return jnp.stack([xg, yg], axis=-1)[None]          # (1, H, W, 2)


def _round_up(x: int, m: int) -> int:
    return (x + m - 1) // m * m


def _dir_kernel(poses_ref, focal_ref, dir_ref, *,
                image_width, image_height, rows_tile):
    """Ray directions for one (batch, ray-row-tile) block.

    poses_ref: (B*12,) f32 SMEM — flattened (B, 3, 4) camera poses
    focal_ref: (B,)    f32 SMEM
    dir_ref:   (1, 3, rows_tile, 128) f32 VMEM — channel-major direction tile
    """
    b = pl.program_id(0)
    n = pl.program_id(1)

    # Flat ray index for this tile (assumes H*W < 2**24 so f32 cast is exact).
    base = n * (rows_tile * 128)
    row_i = jax.lax.broadcasted_iota(jnp.int32, (rows_tile, 128), 0)
    lane_i = jax.lax.broadcasted_iota(jnp.int32, (rows_tile, 128), 1)
    idx = base + row_i * 128 + lane_i

    # Exact x = idx % W, y = idx // W without vector integer division:
    # f32 divide + floor, then a +/-1 integer correction (error is << 1).
    y_i = jnp.floor(idx.astype(jnp.float32) * (1.0 / image_width)).astype(jnp.int32)
    x_i = idx - y_i * image_width
    neg = x_i < 0
    y_i = jnp.where(neg, y_i - 1, y_i)
    x_i = jnp.where(neg, x_i + image_width, x_i)
    big = x_i >= image_width
    y_i = jnp.where(big, y_i + 1, y_i)
    x_i = jnp.where(big, x_i - image_width, x_i)

    inv_f = 1.0 / focal_ref[b]
    dx = (x_i.astype(jnp.float32) - image_width * 0.5) * inv_f
    dy = (y_i.astype(jnp.float32) - image_height * 0.5) * inv_f

    # directions[i] = R[i,0]*dx + R[i,1]*dy + R[i,2]  (d = (dx, dy, 1))
    for i in range(3):                                 # static unroll
        r0 = poses_ref[b * 12 + i * 4 + 0]
        r1 = poses_ref[b * 12 + i * 4 + 1]
        r2 = poses_ref[b * 12 + i * 4 + 2]
        dir_ref[0, i] = r0 * dx + r1 * dy + r2


def ray_sampler_forward(poses, focal_lengths, *, image_width, image_height,
                        min_depth, max_depth, n_pts_per_ray, rows_tile=256):
    """Full-grid (evaluation) RaySampler forward."""
    assert rows_tile % 8 == 0
    B = poses.shape[0]
    H, W = image_height, image_width
    N = H * W

    NR = (N + 127) // 128                      # rays as (NR, 128) rows
    rows_tile = min(rows_tile, _round_up(NR, 8))
    NR_pad = _round_up(NR, rows_tile)          # pad so the grid divides evenly

    poses34 = poses[:, :3, :4].astype(jnp.float32)
    poses_flat = poses34.reshape(B * 12)       # flat 1-D SMEM operand
    focal = focal_lengths.reshape(B).astype(jnp.float32)

    kernel = functools.partial(
        _dir_kernel, image_width=image_width, image_height=image_height,
        rows_tile=rows_tile)

    dirs_cm = pl.pallas_call(
        kernel,
        out_shape=jax.ShapeDtypeStruct((B, 3, NR_pad, 128), jnp.float32),
        grid_spec=pltpu.PrefetchScalarGridSpec(
            num_scalar_prefetch=0,
            grid=(B, NR_pad // rows_tile),
            in_specs=[
                pl.BlockSpec(memory_space=pltpu.MemorySpace.SMEM),  # poses (B*12,)
                pl.BlockSpec(memory_space=pltpu.MemorySpace.SMEM),  # focal (B,)
            ],
            out_specs=pl.BlockSpec((1, 3, rows_tile, 128),
                                   lambda b, n: (b, 0, n, 0)),
        ),
        compiler_params=pltpu.CompilerParams(
            dimension_semantics=("parallel", "parallel")),
    )(poses_flat, focal)

    directions = jnp.transpose(
        dirs_cm.reshape(B, 3, NR_pad * 128)[:, :, :N], (0, 2, 1)
    ).reshape(B, H, W, 3)

    # Pure broadcasts — emitted directly in final layout (no kernel traffic).
    origins = jnp.broadcast_to(poses34[:, None, None, :, 3], (B, H, W, 3))
    if n_pts_per_ray > 0:
        depths = jnp.linspace(min_depth, max_depth, n_pts_per_ray,
                              dtype=jnp.float32)
        lengths = jnp.broadcast_to(depths, (B, H, W, n_pts_per_ray))
    else:
        lengths = jnp.zeros((B, H, W, 0), jnp.float32)
    xys = jnp.broadcast_to(get_xy_grid(H, W), (B, H, W, 2))

    return RayBundle(origins=origins, directions=directions,
                     lengths=lengths, xys=xys)

# TODO(synk): MASK_SAMPLE training path (torch.multinomial ray subsampling) and
# stratified jiggling use RNG + data-dependent gathers; not implemented here.


def _reference(poses, focal_lengths, *, image_width, image_height,
               min_depth, max_depth, n_pts_per_ray):
    """Pure-JAX port of _xy_to_ray_bundle (full-grid path) for verification."""
    B = poses.shape[0]
    H, W = image_height, image_width
    xy_grid = jnp.broadcast_to(get_xy_grid(H, W), (B, H, W, 2))
    p = poses[:, :3, :4].astype(jnp.float32)
    origins = jnp.broadcast_to(p[:, None, None, :, 3], (B, H, W, 3))
    f = focal_lengths.reshape(B, 1, 1).astype(jnp.float32)
    dirs = jnp.stack([(xy_grid[..., 0] - image_width * 0.5) / f,
                      (xy_grid[..., 1] - image_height * 0.5) / f,
                      jnp.ones((B, H, W), jnp.float32)], axis=-1)
    directions = jnp.sum(p[:, None, None, :3, :3] * dirs[..., None, :3], axis=-1)
    depths = jnp.linspace(min_depth, max_depth, n_pts_per_ray, dtype=jnp.float32)
    lengths = jnp.broadcast_to(depths, (B, H, W, n_pts_per_ray))
    return origins, directions, lengths, xy_grid


if __name__ == "__main__":
    # Small, deterministic example shapes (evaluation / full_grid mode).
    B = 2
    IMAGE_H, IMAGE_W = 16, 16
    N_PTS = 8
    MIN_DEPTH, MAX_DEPTH = 0.1, 8.0

    key = jax.random.PRNGKey(0)
    k_pose, k_focal = jax.random.split(key)
    poses = jax.random.normal(k_pose, (B, 4, 4), dtype=jnp.float32)   # sliced to (B,3,4)
    focal_lengths = 50.0 + 10.0 * jax.random.uniform(k_focal, (B,), dtype=jnp.float32)

    bundle = ray_sampler_forward(
        poses, focal_lengths,
        image_width=IMAGE_W, image_height=IMAGE_H,
        min_depth=MIN_DEPTH, max_depth=MAX_DEPTH,
        n_pts_per_ray=N_PTS, rows_tile=256)
    jax.block_until_ready(bundle)

    ref_o, ref_d, ref_l, ref_xy = _reference(
        poses, focal_lengths,
        image_width=IMAGE_W, image_height=IMAGE_H,
        min_depth=MIN_DEPTH, max_depth=MAX_DEPTH, n_pts_per_ray=N_PTS)

    assert jnp.allclose(bundle.directions, ref_d, atol=1e-5, rtol=1e-5)
    assert jnp.allclose(bundle.origins, ref_o, atol=1e-5, rtol=1e-5)
    assert jnp.allclose(bundle.lengths, ref_l, atol=1e-5, rtol=1e-5)
    assert jnp.allclose(bundle.xys, ref_xy)

    print("KERNEL_OK")
</pallas_src>

<mosaic_0001>
module attributes {stable_mosaic.version = 11 : i64} {
  func.func @_dir_kernel(%arg0: i32, %arg1: i32, %arg2: memref<24xf32, #tpu.memory_space<smem>>, %arg3: memref<2xf32, #tpu.memory_space<smem>>, %arg4: memref<1x3x8x128xf32, #tpu.memory_space<vmem>>) attributes {dimension_semantics = [#tpu.dimension_semantics<parallel>, #tpu.dimension_semantics<parallel>], iteration_bounds = array<i64: 2, 1>, scalar_prefetch = 0 : i64, scratch_operands = 0 : i64, tpu.core_type = #tpu.core_type<tc>, window_params = [{transform_indices = @transform_0, window_bounds = array<i64: 24>}, {transform_indices = @transform_1, window_bounds = array<i64: 2>}, {transform_indices = @transform_2, window_bounds = array<i64: 1, 3, 8, 128>}]} {
    %c1024_i32 = arith.constant 1024 : i32
    %0 = arith.muli %arg1, %c1024_i32 : i32
    %1 = tpu.iota {dimensions = array<i32: 0>} : vector<8x128xi32>
    %2 = tpu.iota {dimensions = array<i32: 1>} : vector<8x128xi32>
    %c128_i32 = arith.constant 128 : i32
    %3 = vector.broadcast %c128_i32 : i32 to vector<8x128xi32>
    %4 = arith.muli %1, %3 : vector<8x128xi32>
    %5 = vector.broadcast %0 : i32 to vector<8x128xi32>
    %6 = arith.addi %5, %4 : vector<8x128xi32>
    %7 = arith.addi %6, %2 : vector<8x128xi32>
    %8 = arith.sitofp %7 : vector<8x128xi32> to vector<8x128xf32>
    %cst = arith.constant 6.250000e-02 : f32
    %9 = vector.broadcast %cst : f32 to vector<8x128xf32>
    %10 = arith.mulf %8, %9 : vector<8x128xf32>
    %11 = math.floor %10 : vector<8x128xf32>
    %12 = arith.fptosi %11 : vector<8x128xf32> to vector<8x128xi32>
    %c16_i32 = arith.constant 16 : i32
    %13 = vector.broadcast %c16_i32 : i32 to vector<8x128xi32>
    %14 = arith.muli %12, %13 : vector<8x128xi32>
    %15 = arith.subi %7, %14 : vector<8x128xi32>
    %c0_i32 = arith.constant 0 : i32
    %16 = vector.broadcast %c0_i32 : i32 to vector<8x128xi32>
    %17 = arith.cmpi slt, %15, %16 : vector<8x128xi32>
    %c1_i32 = arith.constant 1 : i32
    %18 = vector.broadcast %c1_i32 : i32 to vector<8x128xi32>
    %19 = arith.subi %12, %18 : vector<8x128xi32>
    %20 = arith.select %17, %19, %12 : vector<8x128xi1>, vector<8x128xi32>
    %c16_i32_0 = arith.constant 16 : i32
    %21 = vector.broadcast %c16_i32_0 : i32 to vector<8x128xi32>
    %22 = arith.addi %15, %21 : vector<8x128xi32>
    %23 = arith.select %17, %22, %15 : vector<8x128xi1>, vector<8x128xi32>
    %c16_i32_1 = arith.constant 16 : i32
    %24 = vector.broadcast %c16_i32_1 : i32 to vector<8x128xi32>
    %25 = arith.cmpi sge, %23, %24 : vector<8x128xi32>
    %c1_i32_2 = arith.constant 1 : i32
    %26 = vector.broadcast %c1_i32_2 : i32 to vector<8x128xi32>
    %27 = arith.addi %20, %26 : vector<8x128xi32>
    %28 = arith.select %25, %27, %20 : vector<8x128xi1>, vector<8x128xi32>
    %c16_i32_3 = arith.constant 16 : i32
    %29 = vector.broadcast %c16_i32_3 : i32 to vector<8x128xi32>
    %30 = arith.subi %23, %29 : vector<8x128xi32>
    %31 = arith.select %25, %30, %23 : vector<8x128xi1>, vector<8x128xi32>
    %32 = arith.index_cast %arg0 : i32 to index
    %33 = memref.load %arg3[%32] : memref<2xf32, #tpu.memory_space<smem>>
    %cst_4 = arith.constant 1.000000e+00 : f32
    %34 = arith.divf %cst_4, %33 : f32
    %35 = arith.sitofp %31 : vector<8x128xi32> to vector<8x128xf32>
    %cst_5 = arith.constant 8.000000e+00 : f32
    %36 = vector.broadcast %cst_5 : f32 to vector<8x128xf32>
    %37 = arith.subf %35, %36 : vector<8x128xf32>
    %38 = vector.broadcast %34 : f32 to vector<8x128xf32>
    %39 = arith.mulf %37, %38 : vector<8x128xf32>
    %40 = arith.sitofp %28 : vector<8x128xi32> to vector<8x128xf32>
    %cst_6 = arith.constant 8.000000e+00 : f32
    %41 = vector.broadcast %cst_6 : f32 to vector<8x128xf32>
    %42 = arith.subf %40, %41 : vector<8x128xf32>
    %43 = vector.broadcast %34 : f32 to vector<8x128xf32>
    %44 = arith.mulf %42, %43 : vector<8x128xf32>
    %c12_i32 = arith.constant 12 : i32
    %45 = arith.muli %arg0, %c12_i32 : i32
    %c0_i32_7 = arith.constant 0 : i32
    %46 = arith.addi %45, %c0_i32_7 : i32
    %c0_i32_8 = arith.constant 0 : i32
    %47 = arith.addi %46, %c0_i32_8 : i32
    %48 = arith.index_cast %47 : i32 to index
    %49 = memref.load %arg2[%48] : memref<24xf32, #tpu.memory_space<smem>>
    %c12_i32_9 = arith.constant 12 : i32
    %50 = arith.muli %arg0, %c12_i32_9 : i32
    %c0_i32_10 = arith.constant 0 : i32
    %51 = arith.addi %50, %c0_i32_10 : i32
    %c1_i32_11 = arith.constant 1 : i32
    %52 = arith.addi %51, %c1_i32_11 : i32
    %53 = arith.index_cast %52 : i32 to index
    %54 = memref.load %arg2[%53] : memref<24xf32, #tpu.memory_space<smem>>
    %c12_i32_12 = arith.constant 12 : i32
    %55 = arith.muli %arg0, %c12_i32_12 : i32
    %c0_i32_13 = arith.constant 0 : i32
    %56 = arith.addi %55, %c0_i32_13 : i32
    %c2_i32 = arith.constant 2 : i32
    %57 = arith.addi %56, %c2_i32 : i32
    %58 = arith.index_cast %57 : i32 to index
    %59 = memref.load %arg2[%58] : memref<24xf32, #tpu.memory_space<smem>>
    %60 = vector.broadcast %49 : f32 to vector<8x128xf32>
    %61 = arith.mulf %60, %39 : vector<8x128xf32>
    %62 = vector.broadcast %54 : f32 to vector<8x128xf32>
    %63 = arith.mulf %62, %44 : vector<8x128xf32>
    %64 = arith.addf %61, %63 : vector<8x128xf32>
    %65 = vector.broadcast %59 : f32 to vector<8x128xf32>
    %66 = arith.addf %64, %65 : vector<8x128xf32>
    %c0 = arith.constant 0 : index
    %c0_14 = arith.constant 0 : index
    %c0_15 = arith.constant 0 : index
    %c0_16 = arith.constant 0 : index
    %67 = vector.load %arg4[%c0, %c0_14, %c0_15, %c0_16] : memref<1x3x8x128xf32, #tpu.memory_space<vmem>>, vector<1x1x8x128xf32>
    %68 = vector.shape_cast %67 : vector<1x1x8x128xf32> to vector<8x128xf32>
    %69 = vector.shape_cast %66 : vector<8x128xf32> to vector<1x1x8x128xf32>
    tpu.vector_store %arg4[%c0, %c0_14, %c0_15, %c0_16], %69 {strides = array<i32>} : memref<1x3x8x128xf32, #tpu.memory_space<vmem>>, vector<1x1x8x128xf32>,
    %c12_i32_17 = arith.constant 12 : i32
    %70 = arith.muli %arg0, %c12_i32_17 : i32
    %c4_i32 = arith.constant 4 : i32
    %71 = arith.addi %70, %c4_i32 : i32
    %c0_i32_18 = arith.constant 0 : i32
    %72 = arith.addi %71, %c0_i32_18 : i32
    %73 = arith.index_cast %72 : i32 to index
    %74 = memref.load %arg2[%73] : memref<24xf32, #tpu.memory_space<smem>>
    %c12_i32_19 = arith.constant 12 : i32
    %75 = arith.muli %arg0, %c12_i32_19 : i32
    %c4_i32_20 = arith.constant 4 : i32
    %76 = arith.addi %75, %c4_i32_20 : i32
    %c1_i32_21 = arith.constant 1 : i32
    %77 = arith.addi %76, %c1_i32_21 : i32
    %78 = arith.index_cast %77 : i32 to index
    %79 = memref.load %arg2[%78] : memref<24xf32, #tpu.memory_space<smem>>
    %c12_i32_22 = arith.constant 12 : i32
    %80 = arith.muli %arg0, %c12_i32_22 : i32
    %c4_i32_23 = arith.constant 4 : i32
    %81 = arith.addi %80, %c4_i32_23 : i32
    %c2_i32_24 = arith.constant 2 : i32
    %82 = arith.addi %81, %c2_i32_24 : i32
    %83 = arith.index_cast %82 : i32 to index
    %84 = memref.load %arg2[%83] : memref<24xf32, #tpu.memory_space<smem>>
    %85 = vector.broadcast %74 : f32 to vector<8x128xf32>
    %86 = arith.mulf %85, %39 : vector<8x128xf32>
    %87 = vector.broadcast %79 : f32 to vector<8x128xf32>
    %88 = arith.mulf %87, %44 : vector<8x128xf32>
    %89 = arith.addf %86, %88 : vector<8x128xf32>
    %90 = vector.broadcast %84 : f32 to vector<8x128xf32>
    %91 = arith.addf %89, %90 : vector<8x128xf32>
    %c0_25 = arith.constant 0 : index
    %c1 = arith.constant 1 : index
    %c0_26 = arith.constant 0 : index
    %c0_27 = arith.constant 0 : index
    %92 = vector.load %arg4[%c0_25, %c1, %c0_26, %c0_27] : memref<1x3x8x128xf32, #tpu.memory_space<vmem>>, vector<1x1x8x128xf32>
    %93 = vector.shape_cast %92 : vector<1x1x8x128xf32> to vector<8x128xf32>
    %94 = vector.shape_cast %91 : vector<8x128xf32> to vector<1x1x8x128xf32>
    tpu.vector_store %arg4[%c0_25, %c1, %c0_26, %c0_27], %94 {strides = array<i32>} : memref<1x3x8x128xf32, #tpu.memory_space<vmem>>, vector<1x1x8x128xf32>,
    %c12_i32_28 = arith.constant 12 : i32
    %95 = arith.muli %arg0, %c12_i32_28 : i32
    %c8_i32 = arith.constant 8 : i32
    %96 = arith.addi %95, %c8_i32 : i32
    %c0_i32_29 = arith.constant 0 : i32
    %97 = arith.addi %96, %c0_i32_29 : i32
    %98 = arith.index_cast %97 : i32 to index
    %99 = memref.load %arg2[%98] : memref<24xf32, #tpu.memory_space<smem>>
    %c12_i32_30 = arith.constant 12 : i32
    %100 = arith.muli %arg0, %c12_i32_30 : i32
    %c8_i32_31 = arith.constant 8 : i32
    %101 = arith.addi %100, %c8_i32_31 : i32
    %c1_i32_32 = arith.constant 1 : i32
    %102 = arith.addi %101, %c1_i32_32 : i32
    %103 = arith.index_cast %102 : i32 to index
    %104 = memref.load %arg2[%103] : memref<24xf32, #tpu.memory_space<smem>>
    %c12_i32_33 = arith.constant 12 : i32
    %105 = arith.muli %arg0, %c12_i32_33 : i32
    %c8_i32_34 = arith.constant 8 : i32
    %106 = arith.addi %105, %c8_i32_34 : i32
    %c2_i32_35 = arith.constant 2 : i32
    %107 = arith.addi %106, %c2_i32_35 : i32
    %108 = arith.index_cast %107 : i32 to index
    %109 = memref.load %arg2[%108] : memref<24xf32, #tpu.memory_space<smem>>
    %110 = vector.broadcast %99 : f32 to vector<8x128xf32>
    %111 = arith.mulf %110, %39 : vector<8x128xf32>
    %112 = vector.broadcast %104 : f32 to vector<8x128xf32>
    %113 = arith.mulf %112, %44 : vector<8x128xf32>
    %114 = arith.addf %111, %113 : vector<8x128xf32>
    %115 = vector.broadcast %109 : f32 to vector<8x128xf32>
    %116 = arith.addf %114, %115 : vector<8x128xf32>
    %c0_36 = arith.constant 0 : index
    %c2 = arith.constant 2 : index
    %c0_37 = arith.constant 0 : index
    %c0_38 = arith.constant 0 : index
    %117 = vector.load %arg4[%c0_36, %c2, %c0_37, %c0_38] : memref<1x3x8x128xf32, #tpu.memory_space<vmem>>, vector<1x1x8x128xf32>
    %118 = vector.shape_cast %117 : vector<1x1x8x128xf32> to vector<8x128xf32>
    %119 = vector.shape_cast %116 : vector<8x128xf32> to vector<1x1x8x128xf32>
    tpu.vector_store %arg4[%c0_36, %c2, %c0_37, %c0_38], %119 {strides = array<i32>} : memref<1x3x8x128xf32, #tpu.memory_space<vmem>>, vector<1x1x8x128xf32>,
    return
  }
  func.func @transform_0(%arg0: i32, %arg1: i32) -> i32 {
    %c0_i32 = arith.constant 0 : i32
    %c0_i32_0 = arith.constant 0 : i32
    return %c0_i32 : i32
  }
  func.func @transform_1(%arg0: i32, %arg1: i32) -> i32 {
    %c0_i32 = arith.constant 0 : i32
    %c0_i32_0 = arith.constant 0 : i32
    return %c0_i32 : i32
  }
  func.func @transform_2(%arg0: i32, %arg1: i32) -> (i32, i32, i32, i32) {
    %c0_i32 = arith.constant 0 : i32
    %c0_i32_0 = arith.constant 0 : i32
    %c0_i32_1 = arith.constant 0 : i32
    return %arg0, %c0_i32, %arg1, %c0_i32_0 : i32, i32, i32, i32
  }
}

</mosaic_0001>

<llo_original>
// kernel: tpu_custom_call.1
$region0: #{tpu_custom_call.1}
  #allocation0 [shape = 'u32[]', space=smem, size = 0x4, offset = 0x4, fixed_abs, tag = 'smem constant byte address 0x4 - core index']
  #allocation1 [shape = 'u32[144,128]{1,0:T(1,128)}', space=vmem, size = 0x12000, scoped, tag = 'internal scratch']
  %s0 = inlined_call_operand.hbm [shape: f32[24], index: 0, kind: input, shape index: {}]
  %s1 = inlined_call_operand.vmem [shape: f32[2], index: 1, kind: input, shape index: {}]
  %s2 = inlined_call_operand.hbm [shape: f32[2,3,8,128], index: 2, kind: output, shape index: {}]
  %s3 = sld [smem:[#allocation0]]
  $region49: #{tpu_custom_call.1} parent=0
    _
  %s5 = ssub.s32 1, %s3
  %s6 = scalar_select 0, %s5, %s3
  $region1: #{tpu_custom_call.1} parent=0
    #allocation2 [shape = 'u8[512]{0}', space=smem, size = 0x200, scoped, tag = 'input window, operand 0, single buffered']
    #allocation3 [shape = 's32[2]{0}', space=sflag, size = 0x8, scoped, tag = 'scoped memory for tpu_custom_call.1']
    #allocation4 [shape = 's32[2]{0}', space=sflag, size = 0x8, scoped, tag = 'scoped memory for tpu_custom_call.1']
    #allocation5 [shape = 's32[2]{0}', space=sflag, size = 0x8, scoped, tag = 'scoped memory for tpu_custom_call.1']
    #allocation6 [shape = 'u8[512]{0}', space=smem, size = 0x200, scoped, tag = 'input window, operand 1, single buffered']
    #allocation7 [shape = 'u8[24576]{0}', space=vmem, size = 0x6000, scoped, tag = 'output window, operand 0']
    %7 = vsyncpa [#allocation4], 0
    %8 = vsyncpa [#allocation5], 0
    %9 = vsyncpa [#allocation3], 0
    %s10 = scalar_lea.sflag [#allocation3], 1
    %11 = vsyncpa %s10, 0
    loop: start=0, step=1, limit=4
    $region2: #{tpu_custom_call.1} parent=1 // loop_pre_header
      _
    $region3: #{tpu_custom_call.1} parent=1 // loop_header
      %s13 = sphi 0, %s17
      %p14 = scmp.ge.s32.totalorder %s13, 4
      %s20 = sphi 0, %s32
      %s21 = sphi 0, %s28
      %s22 = sphi 0, %s20
      %s23 = sphi 0, %s21
      %s24 = sphi 0, %s22
      %s25 = sphi 0, %s23
      %s33 = sphi 0, %s33
      %s35 = sphi 0, %s33
      %s36 = sphi 0, %s35
      %s50 = sphi 0, %s36
      %s54 = sphi 0, %s54
      %s56 = sphi 0, %s54
      %s57 = sphi 0, %s56
      %s71 = sphi 0, %s57
      %s79 = sphi 0, %s81
      %s82 = sphi 0, %s79
      %s83 = sphi 0, %s82
      %s99 = sphi 0, %s83
    $region4: #{tpu_custom_call.1} parent=1 // loop_header_branch
      %16 = sbr.rel (%p14) target = $region8
    $region5: #{tpu_custom_call.1} parent=1 // loop_body
      %s18 = ssub.s32 %s13, 1
      %s19 = ssub.s32 %s13, 2
      %s26 = sadd.s32 1, %s21
      %p27 = scmp.ge.s32.totalorder %s26, 1
      %s28 = scalar_select %p27, 0, %s26
      %s29 = sadd.s32 1, %s20
      %s30 = scalar_select %p27, %s29, %s20
      %p31 = scmp.ge.s32.totalorder %s30, 2
      %s32 = scalar_select %p31, 0, %s30
      %s34 = sadd.s32 %s33, 1
      %p37 = scmp.eq.s32.totalorder %s13, 1
      %p38 = scmp.ne.s32.totalorder %s33, %s35
      %p39 = scmp.eq.s32.totalorder %s13, 0
      %p40 = por %p38, %p39
      %p41 = scmp.ne.s32.totalorder %s33, %s35
      %p42 = scmp.eq.s32.totalorder %s18, 1
      %p43 = por %p41, %p42
      %p44 = scmp.ne.s32.totalorder %s35, %s36
      %p45 = scmp.eq.s32.totalorder %s18, 0
      %p46 = por %p44, %p45
      %p47 = scmp.ne.s32.totalorder %s35, %s36
      %p48 = scmp.eq.s32.totalorder %s19, 1
      %p49 = por %p47, %p48
      %p51 = scmp.ne.s32.totalorder %s36, %s50
      %p52 = scmp.eq.s32.totalorder %s19, 0
      %p53 = por %p51, %p52
      %s55 = sadd.s32 %s54, 1
      %p58 = scmp.eq.s32.totalorder %s13, 1
      %p59 = scmp.ne.s32.totalorder %s54, %s56
      %p60 = scmp.eq.s32.totalorder %s13, 0
      %p61 = por %p59, %p60
      %p62 = scmp.ne.s32.totalorder %s54, %s56
      %p63 = scmp.eq.s32.totalorder %s18, 1
      %p64 = por %p62, %p63
      %p65 = scmp.ne.s32.totalorder %s56, %s57
      %p66 = scmp.eq.s32.totalorder %s18, 0
      %p67 = por %p65, %p66
      %p68 = scmp.ne.s32.totalorder %s56, %s57
      %p69 = scmp.eq.s32.totalorder %s19, 1
      %p70 = por %p68, %p69
      %p72 = scmp.ne.s32.totalorder %s57, %s71
      %p73 = scmp.eq.s32.totalorder %s19, 0
      %p74 = por %p72, %p73
      %s75 = ssub.s32 %s20, %s32
      %s76 = ssub.s32 %s21, %s28
      %s77 = sor.u32 %s75, %s76
      %p78 = scmp.eq.s32.totalorder %s77, 0
      %s80 = sadd.s32 %s79, 1
      %s81 = scalar_select %p78, %s79, %s80
      %p84 = pneg %p78
      %p85 = scmp.eq.s32.totalorder %s13, 1
      %p86 = por %p84, %p85
      %p87 = scmp.ne.s32.totalorder %s79, %s82
      %p88 = scmp.eq.s32.totalorder %s13, 0
      %p89 = por %p87, %p88
      %p90 = scmp.ne.s32.totalorder %s79, %s82
      %p91 = scmp.eq.s32.totalorder %s18, 1
      %p92 = por %p90, %p91
      %p93 = scmp.ne.s32.totalorder %s82, %s83
      %p94 = scmp.eq.s32.totalorder %s18, 0
      %p95 = por %p93, %p94
      %p96 = scmp.ne.s32.totalorder %s82, %s83
      %p97 = scmp.eq.s32.totalorder %s19, 1
      %p98 = por %p96, %p97
      %p100 = scmp.ne.s32.totalorder %s83, %s99
      %p101 = scmp.eq.s32.totalorder %s19, 0
      %p102 = por %p100, %p101
      %p103 = scmp.le.s32.totalorder 1, %s13
      %p104 = scmp.lt.s32.totalorder %s13, 3
      %p105 = pnand %p103, %p104
      %p106 = pneg %p105
      // Predicated region
      $region9: #{tpu_custom_call.1} parent=5 // pred_check
        _
      $region10: #{tpu_custom_call.1} parent=5 // pred_check_branch
        %108 = sbr.rel (%p105) target = $region12
      $region11: #{tpu_custom_call.1} parent=5 // pred_region
        %s109 = ssub.s32 %s13, 1
        // Predicated region
        $region13: #{tpu_custom_call.1} parent=11 // pred_check
          %p110 = pneg %p46
        $region14: #{tpu_custom_call.1} parent=11 // pred_check_branch
          %112 = sbr.rel (%p110) target = $region16
        $region15: #{tpu_custom_call.1} parent=11 // pred_region
          %s114 = ssub.s32 16, 16
          %115 = vsyncadd [#allocation4], %s114
          %118 = dma.hbm_to_smem %s0, 16, [#allocation2], [#allocation4]
        $region16: #{tpu_custom_call.1} parent=11 // pred_fallthru
          _
        // Predicated region
        $region17: #{tpu_custom_call.1} parent=11 // pred_check
          %p119 = pneg %p67
        $region18: #{tpu_custom_call.1} parent=11 // pred_check_branch
          %121 = sbr.rel (%p119) target = $region20
        $region19: #{tpu_custom_call.1} parent=11 // pred_region
          %s123 = ssub.s32 16, 16
          %124 = vsyncadd [#allocation5], %s123
          %s126 = sshll.u32 %s1, 4
          %s127 = int_to_ptr.vmem [resolvable:$true] %s126
          %129 = dma.vmem_to_smem %s127, 16, [#allocation6], [#allocation5]
        $region20: #{tpu_custom_call.1} parent=11 // pred_fallthru
          _
      $region12: #{tpu_custom_call.1} parent=5 // pred_fallthru
        _
      %p130 = scmp.lt.s32.totalorder %s13, 2
      // Predicated region
      $region21: #{tpu_custom_call.1} parent=5 // pred_check
        %p131 = pneg %p130
      $region22: #{tpu_custom_call.1} parent=5 // pred_check_branch
        %133 = sbr.rel (%p131) target = $region24
      $region23: #{tpu_custom_call.1} parent=5 // pred_region
        _
      $region24: #{tpu_custom_call.1} parent=5 // pred_fallthru
        _
      %p134 = scmp.le.s32.totalorder 1, %s13
      %p135 = scmp.lt.s32.totalorder %s13, 3
      %p136 = pnand %p134, %p135
      %p137 = pneg %p136
      // Predicated region
      $region25: #{tpu_custom_call.1} parent=5 // pred_check
        _
      $region26: #{tpu_custom_call.1} parent=5 // pred_check_branch
        %139 = sbr.rel (%p136) target = $region28
      $region27: #{tpu_custom_call.1} parent=5 // pred_region
        %s140 = ssub.s32 %s13, 1
        // Predicated region
        $region29: #{tpu_custom_call.1} parent=27 // pred_check
          %p141 = pneg %p46
        $region30: #{tpu_custom_call.1} parent=27 // pred_check_branch
          %143 = sbr.rel (%p141) target = $region32
        $region31: #{tpu_custom_call.1} parent=27 // pred_region
          %144 = dma.done [#allocation4], 16
        $region32: #{tpu_custom_call.1} parent=27 // pred_fallthru
          _
        // Predicated region
        $region33: #{tpu_custom_call.1} parent=27 // pred_check
          %p145 = pneg %p67
        $region34: #{tpu_custom_call.1} parent=27 // pred_check_branch
          %147 = sbr.rel (%p145) target = $region36
        $region35: #{tpu_custom_call.1} parent=27 // pred_region
          %148 = dma.done [#allocation5], 16
        $region36: #{tpu_custom_call.1} parent=27 // pred_fallthru
          _
        %149 = sfence
        %p150 = pneg %p46
        %p151 = pneg %p43
        %p152 = pneg %p67
        %p153 = pneg %p64
        %p154 = pneg %p95
        %p155 = pneg %p92
        %s156 = sand.u32 %s82, 1
        %s157 = scalar_lea.sflag [#allocation3], %s156
        %s158 = sand.u32 %s82, 1
        %s159 = smul.addr %s158, 24
        %s160 = scalar_lea.vmem [#allocation7], %s159
        %s161 = smul.u32 %s23, 1024
        %v162 = vlaneseq
        %v163 = vshrl.u32 %v162, 7
        %v164 = vlaneseq
        %v165 = vand.u32 %v164, 127
        %v166 = vmul.u32 %v163, 128
        %v167 = vstv %s161
        %v168 = vadd.s32 %v167, %v166
        %v169 = vadd.s32 %v168, %v165
        %v170 = vcvt.s32.f32 %v169
        %v171 = vmul.f32 %v170, 0.0625
        %v172 = vfloor.f32 %v171
        %v173 = vcvt.f32.s32.to.zero.pseudo %v172
        %v174 = vmul.u32 %v173, 16
        %v175 = vsub.s32 %v169, %v174
        %vm176 = vcmp.lt.s32.totalorder %v175, 0
        %v177 = vsub.s32 %v173, 1
        %v178 = vsel %vm176, %v177, %v173
        %v179 = vadd.s32 %v175, 16
        %v180 = vsel %vm176, %v179, %v175
        %vm181 = vcmp.ge.s32.totalorder %v180, 16
        %v182 = vadd.s32 %v178, 1
        %v183 = vsel %vm181, %v182, %v178
        %v184 = vsub.s32 %v180, 16
        %v185 = vsel %vm181, %v184, %v180
        %s186 = sld [smem:[#allocation6 + %s22]]
        %v187 = vstv %s186
        %v188 = vrcp.pop %v187
        %s189 = vtos %v188
        %v190 = vcvt.s32.f32 %v185
        %v191 = vsub.f32 %v190, 8.0
        %v192 = vstv %s189
        %v193 = vmul.f32 %v191, %v192
        %v194 = vcvt.s32.f32 %v183
        %v195 = vsub.f32 %v194, 8.0
        %v196 = vmul.f32 %v195, %v192
        %s197 = smul.u32 %s22, 12
        %s198 = sld [smem:[#allocation2 + %s197]]
        %s199 = sadd.s32 %s197, 1
        %s200 = sld [smem:[#allocation2 + %s199]]
        %s201 = sadd.s32 %s197, 2
        %s202 = sld [smem:[#allocation2 + %s201]]
        %v203 = vstv %s198
        %v204 = vmul.f32 %v203, %v193
        %v205 = vstv %s200
        %v206 = vmul.f32 %v205, %v196
        %v207 = vadd.f32 %v204, %v206
        %v208 = vstv %s202
        %v209 = vadd.f32 %v207, %v208
        %210 = vst [vmem:[%s160] sm:$0xff] %v209
        %s211 = sadd.s32 %s197, 4
        %s212 = sld [smem:[#allocation2 + %s211]]
        %s213 = sadd.s32 %s197, 5
        %s214 = sld [smem:[#allocation2 + %s213]]
        %s215 = sadd.s32 %s197, 6
        %s216 = sld [smem:[#allocation2 + %s215]]
        %v217 = vstv %s212
        %v218 = vmul.f32 %v217, %v193
        %v219 = vstv %s214
        %v220 = vmul.f32 %v219, %v196
        %v221 = vadd.f32 %v218, %v220
        %v222 = vstv %s216
        %v223 = vadd.f32 %v221, %v222
        %s224 = scalar_lea.vmem %s160, 8 [#allocation7]
        %225 = vst [vmem:[%s224] sm:$0xff] %v223
        %s226 = sadd.s32 %s197, 8
        %s227 = sld [smem:[#allocation2 + %s226]]
        %s228 = sadd.s32 %s197, 9
        %s229 = sld [smem:[#allocation2 + %s228]]
        %s230 = sadd.s32 %s197, 10
        %s231 = sld [smem:[#allocation2 + %s230]]
        %v232 = vstv %s227
        %v233 = vmul.f32 %v232, %v193
        %v234 = vstv %s229
        %v235 = vmul.f32 %v234, %v196
        %v236 = vadd.f32 %v233, %v235
        %v237 = vstv %s231
        %v238 = vadd.f32 %v236, %v237
        %s239 = scalar_lea.vmem %s160, 16 [#allocation7]
        %240 = vst [vmem:[%s239] sm:$0xff] %v238
        %s241 = sand.u32 %s82, 1
        %s242 = scalar_lea.sflag [#allocation3], %s241
        %s243 = sand.u32 %s82, 1
        %s244 = smul.addr %s243, 24
        %s245 = scalar_lea.vmem [#allocation7], %s244
        // Predicated region
        $region37: #{tpu_custom_call.1} parent=27 // pred_check
          %p246 = pneg %p92
        $region38: #{tpu_custom_call.1} parent=27 // pred_check_branch
          %248 = sbr.rel (%p246) target = $region40
        $region39: #{tpu_custom_call.1} parent=27 // pred_region
          %s250 = ssub.s32 384, 384
          %251 = vsyncadd %s242, %s250
          %s252 = smul.addr %s22, 3
          %s253 = sadd.s32 %s23, %s252
          %s254 = smul.addr %s253, 128
          %s255 = scalar_lea.hbm %s2, %s254
          %s256 = sshll.u32 %s245, 4
          %s257 = int_to_ptr.vmem [resolvable:$true] %s256
          %262 = dma.vmem_to_hbm [thread:$0]  %s257, 384, %s255, %s242, 128, 128, 8
        $region40: #{tpu_custom_call.1} parent=27 // pred_fallthru
          _
      $region28: #{tpu_custom_call.1} parent=5 // pred_fallthru
        _
      %p263 = scmp.le.s32.totalorder 2, %s13
      // Predicated region
      $region41: #{tpu_custom_call.1} parent=5 // pred_check
        %p264 = pneg %p263
      $region42: #{tpu_custom_call.1} parent=5 // pred_check_branch
        %266 = sbr.rel (%p264) target = $region44
      $region43: #{tpu_custom_call.1} parent=5 // pred_region
        %s267 = ssub.s32 %s13, 2
        // Predicated region
        $region45: #{tpu_custom_call.1} parent=43 // pred_check
          %p268 = pneg %p98
        $region46: #{tpu_custom_call.1} parent=43 // pred_check_branch
          %270 = sbr.rel (%p268) target = $region48
        $region47: #{tpu_custom_call.1} parent=43 // pred_region
          %s271 = sand.u32 %s83, 1
          %s272 = scalar_lea.sflag [#allocation3], %s271
          %s273 = sand.u32 %s83, 1
          %s274 = smul.addr %s273, 24
          %s275 = scalar_lea.vmem [#allocation7], %s274
          %276 = dma.done %s272, 384
        $region48: #{tpu_custom_call.1} parent=43 // pred_fallthru
          _
      $region44: #{tpu_custom_call.1} parent=5 // pred_fallthru
        _
    $region6: #{tpu_custom_call.1} parent=1 // loop_footer
      %s17 = sadd.s32 1, %s13
    $region7: #{tpu_custom_call.1} parent=1 // loop_footer_branch
      %12 = sbr.rel target = $region3
    $region8: #{tpu_custom_call.1} parent=1 // loop_exit
      _
    %277 = vsyncpa [#allocation3], 1
    %s278 = scalar_lea.sflag [#allocation3], 1
    %279 = vsyncpa %s278, 1
    %280 = vsyncpa [#allocation4], 1
    %s281 = scalar_lea.sflag [#allocation4], 1
    %282 = vsyncpa %s281, 1
    %283 = vsyncpa [#allocation5], 1
    %s284 = scalar_lea.sflag [#allocation5], 1
    %285 = vsyncpa %s284, 1

</llo_original>
